<compile_context>
chip_gen: v7x
topology: tpu7x:2x2x1
jax: 0.10.0
libtpu: 0.0.40
codegen_flags: <defaults>
</compile_context>

<pallas_src>
import functools
import math

import jax
import jax.numpy as jnp
from jax.experimental import pallas as pl
from jax.experimental.pallas import tpu as pltpu

EPS = 1e-5                       # PyTorch InstanceNorm default
_VMEM_LIMIT = 48 * 1024 * 1024   # explicit scoped-VMEM budget (safe on v5e/v6e/v7x)


def _stats_kernel(x_ref, sum_ref, ssq_ref):
    """Pass 1: accumulate per-row sum(x) and sum(x*x) across spatial tiles."""
    @pl.when(pl.program_id(1) == 0)
    def _():
        sum_ref[...] = jnp.zeros_like(sum_ref)
        ssq_ref[...] = jnp.zeros_like(ssq_ref)

    x = x_ref[...].astype(jnp.float32)                    # (rows, TS)
    sum_ref[...] += jnp.sum(x, axis=-1, keepdims=True)    # (rows, 1)
    ssq_ref[...] += jnp.sum(x * x, axis=-1, keepdims=True)


def _apply_kernel(x_ref, scale_ref, shift_ref, o_ref):
    """Pass 2: y = x * scale + shift (per-row scalars lane-broadcast over the tile)."""
    x = x_ref[...].astype(jnp.float32)                    # (rows, TS)
    o_ref[...] = (x * scale_ref[...] + shift_ref[...]).astype(o_ref.dtype)


def _row_fill_factor(C, S):
    """Fold each channel into `f` spatial rows so rows = C*f is a multiple of 8."""
    f = 8 // math.gcd(C, 8)
    if f > 1 and S % f == 0:
        return f
    return 1


def _pick_spatial_tile(Sp, rows, itemsize, target_bytes):
    """Largest multiple of 128 that divides Sp with rows*TS*itemsize ~<= target."""
    if Sp % 128 != 0:
        return Sp   # un-tiled lane dim; block_shape == full dim is always legal
    max_ts = max(128, (target_bytes // (rows * itemsize)) // 128 * 128)
    best = 128
    ts = 128
    while ts <= min(max_ts, Sp):
        if Sp % ts == 0:
            best = ts
        ts += 128
    return best


def _instance_norm_pallas(x, gamma, beta, *, spatial_tile_bytes=4 * 1024 * 1024):
    """Affine instance norm over all dims after (N, C), via two Pallas passes."""
    N, C = x.shape[0], x.shape[1]
    S = math.prod(x.shape[2:])
    itemsize = jnp.dtype(x.dtype).itemsize

    # Sublane fill when C < 8: view each channel as f rows of Sp = S // f.
    f = _row_fill_factor(C, S)
    rows = C * f
    Sp = S // f
    xr = x.reshape(N, rows, Sp)

    TS = _pick_spatial_tile(Sp, rows, itemsize, spatial_tile_bytes)
    num_s = Sp // TS

    # ---- Pass 1: per-row sum / sum-of-squares (f32 accumulation in resident outputs).
    row_sum, row_ssq = pl.pallas_call(
        _stats_kernel,
        out_shape=(
            jax.ShapeDtypeStruct((N, rows, 1), jnp.float32),
            jax.ShapeDtypeStruct((N, rows, 1), jnp.float32),
        ),
        grid_spec=pltpu.PrefetchScalarGridSpec(
            num_scalar_prefetch=0,
            grid=(N, num_s),
            in_specs=[pl.BlockSpec((None, rows, TS), lambda n, s: (n, 0, s))],
            out_specs=[
                pl.BlockSpec((None, rows, 1), lambda n, s: (n, 0, 0)),
                pl.BlockSpec((None, rows, 1), lambda n, s: (n, 0, 0)),
            ],
        ),
        compiler_params=pltpu.CompilerParams(
            dimension_semantics=("parallel", "arbitrary"),
            vmem_limit_bytes=_VMEM_LIMIT,
        ),
    )(xr)

    # ---- Tiny (N, C) math in plain XLA: fold rows -> channels, build scale/shift.
    sums = row_sum.reshape(N, C, f).sum(axis=-1)          # (N, C)
    ssqs = row_ssq.reshape(N, C, f).sum(axis=-1)          # (N, C)
    inv_S = jnp.float32(1.0 / S)                          # true S (no padded tiles)
    mean = sums * inv_S
    var = jnp.maximum(ssqs * inv_S - mean * mean, 0.0)    # biased variance, clamped
    rstd = jax.lax.rsqrt(var + jnp.float32(EPS))
    g = gamma.reshape(1, C).astype(jnp.float32)
    b = beta.reshape(1, C).astype(jnp.float32)
    scale = rstd * g                                      # (N, C)
    shift = b - mean * scale                              # (N, C)
    scale_r = jnp.broadcast_to(scale[:, :, None], (N, C, f)).reshape(N, rows, 1)
    shift_r = jnp.broadcast_to(shift[:, :, None], (N, C, f)).reshape(N, rows, 1)

    # ---- Pass 2: fused affine apply.  Spatial-tile axis leads the grid so v7x's
    #      second TensorCore gets work even for N=1; both axes are "parallel".
    yr = pl.pallas_call(
        _apply_kernel,
        out_shape=jax.ShapeDtypeStruct((N, rows, Sp), x.dtype),
        grid_spec=pltpu.PrefetchScalarGridSpec(
            num_scalar_prefetch=0,
            grid=(num_s, N),
            in_specs=[
                pl.BlockSpec((None, rows, TS), lambda s, n: (n, 0, s)),
                pl.BlockSpec((None, rows, 1), lambda s, n: (n, 0, 0)),
                pl.BlockSpec((None, rows, 1), lambda s, n: (n, 0, 0)),
            ],
            out_specs=pl.BlockSpec((None, rows, TS), lambda s, n: (n, 0, s)),
        ),
        compiler_params=pltpu.CompilerParams(
            dimension_semantics=("parallel", "parallel"),
            vmem_limit_bytes=_VMEM_LIMIT,
        ),
    )(xr, scale_r, shift_r)

    return yr.reshape(x.shape)


def switching_instance_norm(x, gamma0, beta0, gamma1, beta1, mode=0,
                            *, spatial_tile_bytes=4 * 1024 * 1024):
    """switching_normalization.forward: Python-level dispatch on `mode` between
    the norm0 and norm1 parameter sets (same as the nn.Module's if/else)."""
    assert mode in (0, 1)
    gamma = gamma0 if mode == 0 else gamma1
    beta = beta0 if mode == 0 else beta1
    return _instance_norm_pallas(x, gamma, beta, spatial_tile_bytes=spatial_tile_bytes)


def _reference(x, gamma, beta):
    """Pure-JAX instance-norm reference."""
    N, C = x.shape[:2]
    xf = x.reshape(N, C, -1).astype(jnp.float32)
    mean = jnp.mean(xf, axis=-1, keepdims=True)
    var = jnp.mean((xf - mean) ** 2, axis=-1, keepdims=True)
    y = (xf - mean) / jnp.sqrt(var + EPS)
    y = y * gamma.reshape(1, C, 1) + beta.reshape(1, C, 1)
    return y.reshape(x.shape).astype(x.dtype)


if __name__ == "__main__":
    key = jax.random.PRNGKey(0)
    kx, k0g, k0b, k1g, k1b = jax.random.split(key, 5)

    N, C, D, H, W = 2, 4, 8, 8, 8       # small NCDHW volume (BraTS-style 3D)
    x = jax.random.normal(kx, (N, C, D, H, W), dtype=jnp.float32)

    # Deterministic, distinct parameters for norm0 and norm1 so `mode` matters.
    gamma0 = 1.0 + 0.1 * jax.random.normal(k0g, (C,), dtype=jnp.float32)
    beta0 = 0.1 * jax.random.normal(k0b, (C,), dtype=jnp.float32)
    gamma1 = 1.0 + 0.1 * jax.random.normal(k1g, (C,), dtype=jnp.float32)
    beta1 = 0.1 * jax.random.normal(k1b, (C,), dtype=jnp.float32)

    fn = functools.partial(switching_instance_norm,
                           gamma0=gamma0, beta0=beta0,
                           gamma1=gamma1, beta1=beta1)

    # Default tiling (single spatial tile at this toy size), both modes.
    y0 = jax.block_until_ready(fn(x, mode=0))
    y1 = jax.block_until_ready(fn(x, mode=1))

    # Force multiple spatial tiles to exercise the tiled-reduction path.
    y0_tiled = jax.block_until_ready(fn(x, mode=0, spatial_tile_bytes=4096))

    r0 = _reference(x, gamma0, beta0)
    r1 = _reference(x, gamma1, beta1)
    assert jnp.allclose(y0, r0, atol=1e-4, rtol=1e-4)
    assert jnp.allclose(y1, r1, atol=1e-4, rtol=1e-4)
    assert jnp.allclose(y0_tiled, r0, atol=1e-4, rtol=1e-4)

    print("KERNEL_OK")
</pallas_src>

<mosaic_0001>
module attributes {stable_mosaic.version = 11 : i64} {
  func.func @_stats_kernel(%arg0: i32, %arg1: i32, %arg2: memref<1x8x256xf32, #tpu.memory_space<vmem>>, %arg3: memref<1x8x1xf32, #tpu.memory_space<vmem>>, %arg4: memref<1x8x1xf32, #tpu.memory_space<vmem>>) attributes {dimension_semantics = [#tpu.dimension_semantics<parallel>, #tpu.dimension_semantics<arbitrary>], iteration_bounds = array<i64: 2, 1>, scalar_prefetch = 0 : i64, scratch_operands = 0 : i64, tpu.core_type = #tpu.core_type<tc>, window_params = [{transform_indices = @transform_0, window_bounds = array<i64: 1, 8, 256>}, {transform_indices = @transform_1, window_bounds = array<i64: 1, 8, 1>}, {transform_indices = @transform_2, window_bounds = array<i64: 1, 8, 1>}]} {
    %c0_i32 = arith.constant 0 : i32
    %0 = arith.cmpi eq, %arg1, %c0_i32 : i32
    %1 = arith.extui %0 : i1 to i32
    %c0_i32_0 = arith.constant 0 : i32
    %2 = arith.cmpi ne, %1, %c0_i32_0 : i32
    scf.if %2 {
      %cst_16 = arith.constant 0.000000e+00 : f32
      %22 = vector.broadcast %cst_16 : f32 to vector<8x1xf32>
      %c0_17 = arith.constant 0 : index
      %c0_18 = arith.constant 0 : index
      %c0_19 = arith.constant 0 : index
      %23 = vector.load %arg3[%c0_17, %c0_18, %c0_19] : memref<1x8x1xf32, #tpu.memory_space<vmem>>, vector<1x8x1xf32>
      %24 = vector.shape_cast %23 : vector<1x8x1xf32> to vector<8x1xf32>
      %25 = vector.shape_cast %22 : vector<8x1xf32> to vector<1x8x1xf32>
      tpu.vector_store %arg3[%c0_17, %c0_18, %c0_19], %25 {strides = array<i32>} : memref<1x8x1xf32, #tpu.memory_space<vmem>>, vector<1x8x1xf32>,
      %cst_20 = arith.constant 0.000000e+00 : f32
      %26 = vector.broadcast %cst_20 : f32 to vector<8x1xf32>
      %c0_21 = arith.constant 0 : index
      %c0_22 = arith.constant 0 : index
      %c0_23 = arith.constant 0 : index
      %27 = vector.load %arg4[%c0_21, %c0_22, %c0_23] : memref<1x8x1xf32, #tpu.memory_space<vmem>>, vector<1x8x1xf32>
      %28 = vector.shape_cast %27 : vector<1x8x1xf32> to vector<8x1xf32>
      %29 = vector.shape_cast %26 : vector<8x1xf32> to vector<1x8x1xf32>
      tpu.vector_store %arg4[%c0_21, %c0_22, %c0_23], %29 {strides = array<i32>} : memref<1x8x1xf32, #tpu.memory_space<vmem>>, vector<1x8x1xf32>,
    } else {
    }
    %c0 = arith.constant 0 : index
    %c0_1 = arith.constant 0 : index
    %c0_2 = arith.constant 0 : index
    %3 = vector.load %arg2[%c0, %c0_1, %c0_2] : memref<1x8x256xf32, #tpu.memory_space<vmem>>, vector<1x8x256xf32>
    %4 = vector.shape_cast %3 : vector<1x8x256xf32> to vector<8x256xf32>
    %c0_3 = arith.constant 0 : index
    %c0_4 = arith.constant 0 : index
    %c0_5 = arith.constant 0 : index
    %5 = vector.load %arg3[%c0_3, %c0_4, %c0_5] : memref<1x8x1xf32, #tpu.memory_space<vmem>>, vector<1x8x1xf32>
    %6 = vector.shape_cast %5 : vector<1x8x1xf32> to vector<8x1xf32>
    %cst = arith.constant dense<0.000000e+00> : vector<8xf32>
    %7 = vector.multi_reduction <add>, %4, %cst [1] : vector<8x256xf32> to vector<8xf32>
    %8 = vector.shape_cast %7 : vector<8xf32> to vector<8x1xf32>
    %9 = arith.addf %6, %8 : vector<8x1xf32>
    %c0_6 = arith.constant 0 : index
    %c0_7 = arith.constant 0 : index
    %c0_8 = arith.constant 0 : index
    %10 = vector.load %arg3[%c0_6, %c0_7, %c0_8] : memref<1x8x1xf32, #tpu.memory_space<vmem>>, vector<1x8x1xf32>
    %11 = vector.shape_cast %10 : vector<1x8x1xf32> to vector<8x1xf32>
    %12 = vector.shape_cast %9 : vector<8x1xf32> to vector<1x8x1xf32>
    tpu.vector_store %arg3[%c0_6, %c0_7, %c0_8], %12 {strides = array<i32>} : memref<1x8x1xf32, #tpu.memory_space<vmem>>, vector<1x8x1xf32>,
    %c0_9 = arith.constant 0 : index
    %c0_10 = arith.constant 0 : index
    %c0_11 = arith.constant 0 : index
    %13 = vector.load %arg4[%c0_9, %c0_10, %c0_11] : memref<1x8x1xf32, #tpu.memory_space<vmem>>, vector<1x8x1xf32>
    %14 = vector.shape_cast %13 : vector<1x8x1xf32> to vector<8x1xf32>
    %15 = arith.mulf %4, %4 : vector<8x256xf32>
    %cst_12 = arith.constant dense<0.000000e+00> : vector<8xf32>
    %16 = vector.multi_reduction <add>, %15, %cst_12 [1] : vector<8x256xf32> to vector<8xf32>
    %17 = vector.shape_cast %16 : vector<8xf32> to vector<8x1xf32>
    %18 = arith.addf %14, %17 : vector<8x1xf32>
    %c0_13 = arith.constant 0 : index
    %c0_14 = arith.constant 0 : index
    %c0_15 = arith.constant 0 : index
    %19 = vector.load %arg4[%c0_13, %c0_14, %c0_15] : memref<1x8x1xf32, #tpu.memory_space<vmem>>, vector<1x8x1xf32>
    %20 = vector.shape_cast %19 : vector<1x8x1xf32> to vector<8x1xf32>
    %21 = vector.shape_cast %18 : vector<8x1xf32> to vector<1x8x1xf32>
    tpu.vector_store %arg4[%c0_13, %c0_14, %c0_15], %21 {strides = array<i32>} : memref<1x8x1xf32, #tpu.memory_space<vmem>>, vector<1x8x1xf32>,
    return
  }
  func.func @transform_0(%arg0: i32, %arg1: i32) -> (i32, i32, i32) {
    %c0_i32 = arith.constant 0 : i32
    %c0_i32_0 = arith.constant 0 : i32
    return %arg0, %c0_i32, %arg1 : i32, i32, i32
  }
  func.func @transform_1(%arg0: i32, %arg1: i32) -> (i32, i32, i32) {
    %c0_i32 = arith.constant 0 : i32
    %c0_i32_0 = arith.constant 0 : i32
    %c0_i32_1 = arith.constant 0 : i32
    return %arg0, %c0_i32, %c0_i32_0 : i32, i32, i32
  }
  func.func @transform_2(%arg0: i32, %arg1: i32) -> (i32, i32, i32) {
    %c0_i32 = arith.constant 0 : i32
    %c0_i32_0 = arith.constant 0 : i32
    %c0_i32_1 = arith.constant 0 : i32
    return %arg0, %c0_i32, %c0_i32_0 : i32, i32, i32
  }
}

</mosaic_0001>

<llo_original>
// kernel: tpu_custom_call.1
$region0: #{tpu_custom_call.1}
  #allocation0 [shape = 'u32[]', space=smem, size = 0x4, offset = 0x4, fixed_abs, tag = 'smem constant byte address 0x4 - core index']
  #allocation1 [shape = 'u32[144,128]{1,0:T(1,128)}', space=vmem, size = 0x12000, scoped, tag = 'internal scratch']
  %s0 = inlined_call_operand.hbm [shape: f32[2,8,256], index: 0, kind: input, shape index: {}]
  %s1 = inlined_call_operand.vmem [shape: f32[2,8,1], index: 1, kind: output, shape index: {0}]
  %s2 = inlined_call_operand.vmem [shape: f32[2,8,1], index: 2, kind: output, shape index: {1}]
  %3 = xla_tuple %s1, %s2
  %s4 = sld [smem:[#allocation0]]
  $region53: #{tpu_custom_call.1} parent=0
    _
  %s6 = ssub.s32 1, %s4
  %s7 = scalar_select 0, %s6, %s4
  $region1: #{tpu_custom_call.1} parent=0
    #allocation2 [shape = 'u8[16384]{0}', space=vmem, size = 0x4000, scoped, tag = 'input window, operand 0']
    #allocation3 [shape = 's32[2]{0}', space=sflag, size = 0x8, scoped, tag = 'scoped memory for tpu_custom_call.1']
    %8 = vsyncpa [#allocation3], 0
    %s9 = scalar_lea.sflag [#allocation3], 1
    %10 = vsyncpa %s9, 0
    loop: start=0, step=1, limit=4
    $region2: #{tpu_custom_call.1} parent=1 // loop_pre_header
      _
    $region3: #{tpu_custom_call.1} parent=1 // loop_header
      %s12 = sphi 0, %s16
      %p13 = scmp.ge.s32.totalorder %s12, 4
      %s19 = sphi 0, %s31
      %s20 = sphi 0, %s27
      %s21 = sphi 0, %s19
      %s22 = sphi 0, %s20
      %s23 = sphi 0, %s21
      %s24 = sphi 0, %s22
      %s36 = sphi 0, %s38
      %s39 = sphi 0, %s36
      %s40 = sphi 0, %s39
      %s56 = sphi 0, %s40
      %s62 = sphi 0, %s64
      %s65 = sphi 0, %s62
      %s66 = sphi 0, %s65
      %s82 = sphi 0, %s66
      %s88 = sphi 0, %s90
      %s91 = sphi 0, %s88
      %s92 = sphi 0, %s91
      %s108 = sphi 0, %s92
    $region4: #{tpu_custom_call.1} parent=1 // loop_header_branch
      %15 = sbr.rel (%p13) target = $region8
    $region5: #{tpu_custom_call.1} parent=1 // loop_body
      %s17 = ssub.s32 %s12, 1
      %s18 = ssub.s32 %s12, 2
      %s25 = sadd.s32 1, %s20
      %p26 = scmp.ge.s32.totalorder %s25, 1
      %s27 = scalar_select %p26, 0, %s25
      %s28 = sadd.s32 1, %s19
      %s29 = scalar_select %p26, %s28, %s19
      %p30 = scmp.ge.s32.totalorder %s29, 2
      %s31 = scalar_select %p30, 0, %s29
      %s32 = ssub.s32 %s19, %s31
      %s33 = ssub.s32 %s20, %s27
      %s34 = sor.u32 %s32, %s33
      %p35 = scmp.eq.s32.totalorder %s34, 0
      %s37 = sadd.s32 %s36, 1
      %s38 = scalar_select %p35, %s36, %s37
      %p41 = pneg %p35
      %p42 = scmp.eq.s32.totalorder %s12, 1
      %p43 = por %p41, %p42
      %p44 = scmp.ne.s32.totalorder %s36, %s39
      %p45 = scmp.eq.s32.totalorder %s12, 0
      %p46 = por %p44, %p45
      %p47 = scmp.ne.s32.totalorder %s36, %s39
      %p48 = scmp.eq.s32.totalorder %s17, 1
      %p49 = por %p47, %p48
      %p50 = scmp.ne.s32.totalorder %s39, %s40
      %p51 = scmp.eq.s32.totalorder %s17, 0
      %p52 = por %p50, %p51
      %p53 = scmp.ne.s32.totalorder %s39, %s40
      %p54 = scmp.eq.s32.totalorder %s18, 1
      %p55 = por %p53, %p54
      %p57 = scmp.ne.s32.totalorder %s40, %s56
      %p58 = scmp.eq.s32.totalorder %s18, 0
      %p59 = por %p57, %p58
      %s60 = ssub.s32 %s19, %s31
      %p61 = scmp.eq.s32.totalorder %s60, 0
      %s63 = sadd.s32 %s62, 1
      %s64 = scalar_select %p61, %s62, %s63
      %p67 = pneg %p61
      %p68 = scmp.eq.s32.totalorder %s12, 1
      %p69 = por %p67, %p68
      %p70 = scmp.ne.s32.totalorder %s62, %s65
      %p71 = scmp.eq.s32.totalorder %s12, 0
      %p72 = por %p70, %p71
      %p73 = scmp.ne.s32.totalorder %s62, %s65
      %p74 = scmp.eq.s32.totalorder %s17, 1
      %p75 = por %p73, %p74
      %p76 = scmp.ne.s32.totalorder %s65, %s66
      %p77 = scmp.eq.s32.totalorder %s17, 0
      %p78 = por %p76, %p77
      %p79 = scmp.ne.s32.totalorder %s65, %s66
      %p80 = scmp.eq.s32.totalorder %s18, 1
      %p81 = por %p79, %p80
      %p83 = scmp.ne.s32.totalorder %s66, %s82
      %p84 = scmp.eq.s32.totalorder %s18, 0
      %p85 = por %p83, %p84
      %s86 = ssub.s32 %s19, %s31
      %p87 = scmp.eq.s32.totalorder %s86, 0
      %s89 = sadd.s32 %s88, 1
      %s90 = scalar_select %p87, %s88, %s89
      %p93 = pneg %p87
      %p94 = scmp.eq.s32.totalorder %s12, 1
      %p95 = por %p93, %p94
      %p96 = scmp.ne.s32.totalorder %s88, %s91
      %p97 = scmp.eq.s32.totalorder %s12, 0
      %p98 = por %p96, %p97
      %p99 = scmp.ne.s32.totalorder %s88, %s91
      %p100 = scmp.eq.s32.totalorder %s17, 1
      %p101 = por %p99, %p100
      %p102 = scmp.ne.s32.totalorder %s91, %s92
      %p103 = scmp.eq.s32.totalorder %s17, 0
      %p104 = por %p102, %p103
      %p105 = scmp.ne.s32.totalorder %s91, %s92
      %p106 = scmp.eq.s32.totalorder %s18, 1
      %p107 = por %p105, %p106
      %p109 = scmp.ne.s32.totalorder %s92, %s108
      %p110 = scmp.eq.s32.totalorder %s18, 0
      %p111 = por %p109, %p110
      %p112 = scmp.le.s32.totalorder 1, %s12
      %p113 = scmp.lt.s32.totalorder %s12, 3
      %p114 = pnand %p112, %p113
      %p115 = pneg %p114
      // Predicated region
      $region9: #{tpu_custom_call.1} parent=5 // pred_check
        _
      $region10: #{tpu_custom_call.1} parent=5 // pred_check_branch
        %117 = sbr.rel (%p114) target = $region12
      $region11: #{tpu_custom_call.1} parent=5 // pred_region
        %s118 = ssub.s32 %s12, 1
      $region12: #{tpu_custom_call.1} parent=5 // pred_fallthru
        _
      %p119 = scmp.lt.s32.totalorder %s12, 2
      // Predicated region
      $region13: #{tpu_custom_call.1} parent=5 // pred_check
        %p120 = pneg %p119
      $region14: #{tpu_custom_call.1} parent=5 // pred_check_branch
        %122 = sbr.rel (%p120) target = $region16
      $region15: #{tpu_custom_call.1} parent=5 // pred_region
        // Predicated region
        $region17: #{tpu_custom_call.1} parent=15 // pred_check
          %p123 = pneg %p46
        $region18: #{tpu_custom_call.1} parent=15 // pred_check_branch
          %125 = sbr.rel (%p123) target = $region20
        $region19: #{tpu_custom_call.1} parent=15 // pred_region
          %s126 = sand.u32 %s36, 1
          %s127 = scalar_lea.sflag [#allocation3], %s126
          %s128 = sand.u32 %s36, 1
          %s129 = smul.addr %s128, 16
          %s130 = scalar_lea.vmem [#allocation2], %s129
          %s131 = smul.u32 2, %s20
          %s133 = ssub.s32 256, 256
          %134 = vsyncadd %s127, %s133
          %s135 = smul.addr %s19, 2
          %s136 = sadd.s32 %s131, %s135
          %s137 = smul.addr %s136, 128
          %s138 = scalar_lea.hbm %s0, %s137
          %s140 = sshll.u32 %s130, 4
          %s141 = int_to_ptr.vmem [resolvable:$true] %s140
          %143 = dma.hbm_to_vmem [thread:$0]  %s138, 256, %s141, %s127
        $region20: #{tpu_custom_call.1} parent=15 // pred_fallthru
          _
      $region16: #{tpu_custom_call.1} parent=5 // pred_fallthru
        _
      %p144 = scmp.le.s32.totalorder 1, %s12
      %p145 = scmp.lt.s32.totalorder %s12, 3
      %p146 = pnand %p144, %p145
      %p147 = pneg %p146
      // Predicated region
      $region21: #{tpu_custom_call.1} parent=5 // pred_check
        _
      $region22: #{tpu_custom_call.1} parent=5 // pred_check_branch
        %149 = sbr.rel (%p146) target = $region24
      $region23: #{tpu_custom_call.1} parent=5 // pred_region
        %s150 = ssub.s32 %s12, 1
        %s151 = sand.u32 %s39, 1
        %s152 = scalar_lea.sflag [#allocation3], %s151
        %s153 = sand.u32 %s39, 1
        %s154 = smul.addr %s153, 16
        %s155 = scalar_lea.vmem [#allocation2], %s154
        // Predicated region
        $region25: #{tpu_custom_call.1} parent=23 // pred_check
          %p156 = pneg %p52
        $region26: #{tpu_custom_call.1} parent=23 // pred_check_branch
          %158 = sbr.rel (%p156) target = $region28
        $region27: #{tpu_custom_call.1} parent=23 // pred_region
          %159 = dma.done %s152, 256
        $region28: #{tpu_custom_call.1} parent=23 // pred_fallthru
          _
        %s160 = sand.u32 %s39, 1
        %s161 = scalar_lea.sflag [#allocation3], %s160
        %s162 = sand.u32 %s39, 1
        %s163 = smul.addr %s162, 16
        %s164 = scalar_lea.vmem [#allocation2], %s163
        %p165 = pneg %p52
        %p166 = pneg %p49
        %p167 = pneg %p78
        %p168 = pneg %p75
        %p169 = scmp.lt.s32.totalorder %s21, 1
        %s170 = scalar_select %p169, %s21, 1
        %s171 = smul.addr %s170, 8
        %s172 = scalar_lea.vmem %s1, %s171
        %p173 = pneg %p104
        %p174 = pneg %p101
        %p175 = scmp.lt.s32.totalorder %s21, 1
        %s176 = scalar_select %p175, %s21, 1
        %s177 = smul.addr %s176, 8
        %s178 = scalar_lea.vmem %s2, %s177
        %s179 = smul.u32 2, %s22
        %p180 = scmp.lt.s32.totalorder %s21, 1
        %s181 = scalar_select %p180, %s21, 1
        %s182 = smul.addr %s181, 8
        %s183 = scalar_lea.vmem %s1, %s182
        %p184 = scmp.lt.s32.totalorder %s21, 1
        %s185 = scalar_select %p184, %s21, 1
        %s186 = smul.addr %s185, 8
        %s187 = scalar_lea.vmem %s2, %s186
        %p188 = scmp.eq.s32.totalorder %s22, 0
        // Predicated region
        $region29: #{tpu_custom_call.1} parent=23 // pred_check
          %p189 = pneg %p188
        $region30: #{tpu_custom_call.1} parent=23 // pred_check_branch
          %191 = sbr.rel (%p189) target = $region32
        $region31: #{tpu_custom_call.1} parent=23 // pred_region
          %vm192 = vcmask 7168
          %193 = vst.msk [vmem:[%s183] sm:$0xff] %vm192, 0.0
          %194 = vst.msk [vmem:[%s187] sm:$0xff] %vm192, 0.0
        $region32: #{tpu_custom_call.1} parent=23 // pred_fallthru
          _
        %v195 = vld [vmem:[%s155] sm:$0xff]
        %v196 = vld [vmem:[%s155 + $0x8] sm:$0xff]
        %v197 = vld [vmem:[%s183] sm:$0xff]
        %v198 = vadd.f32 %v195, %v196
        %199 = vadd.xlane.f32.xlu0 %v198
        %v200 = vpop.xlane.xlu0 %199
        %v201 = vadd.f32 %v197, %v200
        %vm202 = vcmask 7168
        %203 = vst.msk [vmem:[%s183] sm:$0xff] %vm202, %v201
        %v204 = vld [vmem:[%s187] sm:$0xff]
        %v205 = vmul.f32 %v195, %v195
        %v206 = vmul.f32 %v196, %v196
        %v207 = vadd.f32 %v205, %v206
        %208 = vadd.xlane.f32.xlu0 %v207
        %v209 = vpop.xlane.xlu0 %208
        %v210 = vadd.f32 %v204, %v209
        %211 = vst.msk [vmem:[%s187] sm:$0xff] %vm202, %v210
        %p212 = scmp.lt.s32.totalorder %s21, 1
        %s213 = scalar_select %p212, %s21, 1
        %s214 = smul.addr %s213, 8
        %s215 = scalar_lea.vmem %s1, %s214
        %p216 = scmp.lt.s32.totalorder %s21, 1
        %s217 = scalar_select %p216, %s21, 1
        %s218 = smul.addr %s217, 8
        %s219 = scalar_lea.vmem %s2, %s218
        // Predicated region
        $region33: #{tpu_custom_call.1} parent=23 // pred_check
          %p220 = pneg %p75
        $region34: #{tpu_custom_call.1} parent=23 // pred_check_branch
          %222 = sbr.rel (%p220) target = $region36
        $region35: #{tpu_custom_call.1} parent=23 // pred_region
          _
        $region36: #{tpu_custom_call.1} parent=23 // pred_fallthru
          _
        // Predicated region
        $region37: #{tpu_custom_call.1} parent=23 // pred_check
          %p223 = pneg %p101
        $region38: #{tpu_custom_call.1} parent=23 // pred_check_branch
          %225 = sbr.rel (%p223) target = $region40
        $region39: #{tpu_custom_call.1} parent=23 // pred_region
          _
        $region40: #{tpu_custom_call.1} parent=23 // pred_fallthru
          _
      $region24: #{tpu_custom_call.1} parent=5 // pred_fallthru
        _
      %p226 = scmp.le.s32.totalorder 2, %s12
      // Predicated region
      $region41: #{tpu_custom_call.1} parent=5 // pred_check
        %p227 = pneg %p226
      $region42: #{tpu_custom_call.1} parent=5 // pred_check_branch
        %229 = sbr.rel (%p227) target = $region44
      $region43: #{tpu_custom_call.1} parent=5 // pred_region
        %s230 = ssub.s32 %s12, 2
        // Predicated region
        $region45: #{tpu_custom_call.1} parent=43 // pred_check
          %p231 = pneg %p81
        $region46: #{tpu_custom_call.1} parent=43 // pred_check_branch
          %233 = sbr.rel (%p231) target = $region48
        $region47: #{tpu_custom_call.1} parent=43 // pred_region
          %p234 = scmp.lt.s32.totalorder %s23, 1
          %s235 = scalar_select %p234, %s23, 1
          %s236 = smul.addr %s235, 8
          %s237 = scalar_lea.vmem %s1, %s236
        $region48: #{tpu_custom_call.1} parent=43 // pred_fallthru
          _
        // Predicated region
        $region49: #{tpu_custom_call.1} parent=43 // pred_check
          %p238 = pneg %p107
        $region50: #{tpu_custom_call.1} parent=43 // pred_check_branch
          %240 = sbr.rel (%p238) target = $region52
        $region51: #{tpu_custom_call.1} parent=43 // pred_region
          %p241 = scmp.lt.s32.totalorder %s23, 1
          %s242 = scalar_select %p241, %s23, 1
          %s243 = smul.addr %s242, 8
          %s244 = scalar_lea.vmem %s2, %s243
        $region52: #{tpu_custom_call.1} parent=43 // pred_fallthru
          _
      $region44: #{tpu_custom_call.1} parent=5 // pred_fallthru
        _
    $region6: #{tpu_custom_call.1} parent=1 // loop_footer
      %s16 = sadd.s32 1, %s12
    $region7: #{tpu_custom_call.1} parent=1 // loop_footer_branch
      %11 = sbr.rel target = $region3
    $region8: #{tpu_custom_call.1} parent=1 // loop_exit
      _
    %245 = vsyncpa [#allocation3], 1
    %s246 = scalar_lea.sflag [#allocation3], 1
    %247 = vsyncpa %s246, 1

</llo_original>
